<compile_context>
chip_gen: v5e
topology: v5e:2x2
jax: 0.10.0
libtpu: 0.0.40
codegen_flags: <defaults>
</compile_context>

<pallas_src>
import numpy as np
import jax
import jax.numpy as jnp
from jax.experimental import pallas as pl
from jax.experimental.pallas import tpu as pltpu


def _round_up(x: int, m: int) -> int:
    return ((x + m - 1) // m) * m


def _vmem_capacity_bytes() -> int:
    try:
        return int(pltpu.get_tpu_info().vmem_capacity_bytes)
    except Exception:
        return 64 << 20  # conservative default = v7x physical VMEM


# ----------------------------- Pallas kernel --------------------------------
def _pe_fused_kernel(x_ref, w_ref, out_ref):
    # One MXU call per row tile: [tm, Kp] @ [Kp, Np] with f32 accumulation.
    # Bias is folded into W (ones column in X), so no VPU add is needed.
    acc = jnp.dot(x_ref[...], w_ref[...], preferred_element_type=jnp.float32)
    out_ref[...] = acc.astype(out_ref.dtype)


# --------------------- one-time parameter packing (cold path) ----------------
def pack_pe_weights(w_wsp, b_wsp, w_le, b_le, *, compute_dtype=jnp.bfloat16):
    """Pack the two Linear layers into one lane-dense block-diagonal weight
    matrix with the biases folded into the last real contraction row.
    Call once (outside the per-forward hot path) and reuse the result."""
    max_nodes, d_half = w_wsp.shape
    d_model = 2 * d_half
    k = 2 * max_nodes + 1                    # +1 row: folded bias (ones column in X)
    k_pad = _round_up(k, 128)                # contraction dim -> multiple of 128
    n_pad = _round_up(d_model, 128)          # output lane dim -> multiple of 128
    w = jnp.zeros((k_pad, n_pad), compute_dtype)
    w = w.at[:max_nodes, :d_half].set(w_wsp.astype(compute_dtype))
    w = w.at[max_nodes:2 * max_nodes, d_half:d_model].set(w_le.astype(compute_dtype))
    w = w.at[2 * max_nodes, :d_half].set(b_wsp.reshape(-1).astype(compute_dtype))
    w = w.at[2 * max_nodes, d_half:d_model].set(b_le.reshape(-1).astype(compute_dtype))
    return w


# ------------------------------- forward (hot path) --------------------------
def graph_bert_positional_encoding_pallas(
    wsp, le, w_packed, *, d_model,
    tile_rows: int = 1024, target_grid_steps: int = 4,
    compute_dtype=None, out_dtype=None,
):
    """Fused positional encoding: concat(wsp@W_wsp+b_wsp, le@W_le+b_le, -1)."""
    num_nodes, max_nodes = wsp.shape
    if compute_dtype is None:
        # bf16 represents integer WSP distances exactly only up to 256.
        compute_dtype = jnp.bfloat16 if max_nodes <= 256 else jnp.float32
    if out_dtype is None:
        out_dtype = compute_dtype
    if w_packed.dtype != compute_dtype:
        w_packed = w_packed.astype(compute_dtype)

    k_pad, n_pad = w_packed.shape
    itemsize = jnp.dtype(compute_dtype).itemsize
    out_itemsize = jnp.dtype(out_dtype).itemsize

    # ---- generation-aware VMEM budget (headroom below physical VMEM) ----
    phys_vmem = _vmem_capacity_bytes()
    vmem_cap = max(32 << 20, phys_vmem - (12 << 20))  # ~52 MiB v7x, ~116 MiB v5e/v6e

    # ---- row tile: amortize grid-step overhead, fit VMEM (single-buffered W),
    #      keep >= target_grid_steps when num_nodes allows, avoid padding waste.
    tile_budget = int(vmem_cap * 0.8) - k_pad * n_pad * itemsize
    tm_vmem = tile_budget // (2 * (k_pad * itemsize + n_pad * out_itemsize))
    tm_vmem = max(8, (int(tm_vmem) // 8) * 8)
    tm_split = _round_up(pl.cdiv(max(num_nodes, 1), target_grid_steps), 8)
    rows8 = _round_up(max(num_nodes, 1), 8)
    tm = max(8, min(tile_rows, tm_vmem, tm_split, rows8))
    rows_pad = _round_up(num_nodes, tm)
    grid = (rows_pad // tm,)
    # TODO(synk): for many small graphs, batch them as an extra leading
    #             "parallel" grid axis so both v7x TensorCores get work.

    # X = [wsp | le | 1] built directly in compute_dtype (no f32 round-trip).
    x = jnp.zeros((rows_pad, k_pad), compute_dtype)
    x = x.at[:num_nodes, :max_nodes].set(wsp.astype(compute_dtype))
    x = x.at[:num_nodes, max_nodes:2 * max_nodes].set(le.astype(compute_dtype))
    x = x.at[:num_nodes, 2 * max_nodes].set(jnp.ones((num_nodes,), compute_dtype))

    vmem_bytes = (
        2 * tm * k_pad * itemsize          # X tiles, double-buffered
        + k_pad * n_pad * itemsize         # resident W, single-buffered
        + 2 * tm * n_pad * out_itemsize    # output tiles, double-buffered
    )
    vmem_limit = int(min(vmem_cap, max(16 << 20, int(vmem_bytes * 1.5))))

    def _run(single_buffer_w: bool):
        w_kwargs = {"pipeline_mode": pl.Buffered(1)} if single_buffer_w else {}
        return pl.pallas_call(
            _pe_fused_kernel,
            out_shape=jax.ShapeDtypeStruct((rows_pad, n_pad), out_dtype),
            grid=grid,
            in_specs=[
                pl.BlockSpec((tm, k_pad), lambda i: (i, 0)),               # X row tile
                pl.BlockSpec((k_pad, n_pad), lambda i: (0, 0), **w_kwargs),  # resident W
            ],
            out_specs=pl.BlockSpec((tm, n_pad), lambda i: (i, 0)),          # lane-dense out
            compiler_params=pltpu.CompilerParams(
                dimension_semantics=("parallel",),     # row axis: pipeline + 2-TC on v7x
                vmem_limit_bytes=vmem_limit,
            ),
        )(x, w_packed)

    try:
        out_padded = _run(True)    # grid-invariant W: single-buffered
    except Exception:
        out_padded = _run(False)   # fallback if Buffered(1) is rejected

    # Strip row / lane padding (consumers wanting lane-dense layout may skip this).
    return out_padded[:num_nodes, :d_model]


# ------------------------ plain-JAX graph preprocessing ----------------------
# TODO(synk): networkx shortest paths and scipy eigh have no Pallas equivalent;
#             reproduced here with min-plus squaring and jnp.linalg.eigh.
def compute_wsp_matrix(edge_index, num_nodes, max_nodes):
    INF = 1e9
    src, dst = edge_index[0], edge_index[1]
    dist = jnp.full((num_nodes, num_nodes), INF, dtype=jnp.float32)
    dist = dist.at[jnp.arange(num_nodes), jnp.arange(num_nodes)].set(0.0)
    dist = dist.at[src, dst].set(1.0)
    dist = dist.at[dst, src].set(1.0)
    n_iter = max(1, int(np.ceil(np.log2(max(num_nodes, 2)))))
    for _ in range(n_iter):
        dist = jnp.min(dist[:, :, None] + dist[None, :, :], axis=1)
    dist = jnp.where(dist >= INF / 2, float(max_nodes), dist)
    dist = dist.at[jnp.arange(num_nodes), jnp.arange(num_nodes)].set(0.0)
    wsp = jnp.zeros((num_nodes, max_nodes), dtype=jnp.float32)
    wsp = wsp.at[:, :num_nodes].set(dist)
    return wsp


def compute_laplacian_encoding(edge_index, num_nodes, max_nodes):
    src, dst = edge_index[0], edge_index[1]
    A = jnp.zeros((num_nodes, num_nodes), dtype=jnp.float32)
    A = A.at[src, dst].set(1.0)
    A = A.at[dst, src].set(1.0)
    deg = A.sum(axis=1)
    dinv = jnp.where(deg > 0, 1.0 / jnp.sqrt(deg), 0.0)
    L = jnp.eye(num_nodes, dtype=jnp.float32) - dinv[:, None] * A * dinv[None, :]
    _, eigvecs = jnp.linalg.eigh(L)
    padded = jnp.zeros((num_nodes, max_nodes), dtype=jnp.float32)
    padded = padded.at[:, :num_nodes].set(eigvecs.astype(jnp.float32))
    return padded


# ----------------------------------- main ------------------------------------
if __name__ == "__main__":
    d_model = 32
    max_nodes = 16
    num_nodes = 8
    d_half = d_model // 2

    # Deterministic parameter init (mirrors nn.Linear default U(-1/sqrt(in), +1/sqrt(in)))
    key = jax.random.PRNGKey(0)
    k1, k2, k3, k4 = jax.random.split(key, 4)
    bound = 1.0 / np.sqrt(max_nodes)
    w_wsp = jax.random.uniform(k1, (max_nodes, d_half), jnp.float32, -bound, bound)
    b_wsp = jax.random.uniform(k2, (1, d_half), jnp.float32, -bound, bound)
    w_le = jax.random.uniform(k3, (max_nodes, d_half), jnp.float32, -bound, bound)
    b_le = jax.random.uniform(k4, (1, d_half), jnp.float32, -bound, bound)

    # Small deterministic graph: ring on 8 nodes plus one chord.
    edges = np.array(
        [[0, 1, 2, 3, 4, 5, 6, 7, 0],
         [1, 2, 3, 4, 5, 6, 7, 0, 4]], dtype=np.int32)
    edge_index = jnp.asarray(edges)

    wsp_matrix = compute_wsp_matrix(edge_index, num_nodes, max_nodes)
    le_matrix = compute_laplacian_encoding(edge_index, num_nodes, max_nodes)

    # Pack weights ONCE (cold path), then run the fused kernel (hot path).
    compute_dtype = jnp.bfloat16
    w_packed = pack_pe_weights(w_wsp, b_wsp, w_le, b_le, compute_dtype=compute_dtype)

    out = graph_bert_positional_encoding_pallas(
        wsp_matrix, le_matrix, w_packed, d_model=d_model,
        compute_dtype=compute_dtype)
    out = jax.block_until_ready(out)

    # Reference in plain JAX with matching bf16-operand / f32-accumulate numerics.
    cd = compute_dtype
    ref = jnp.concatenate(
        [jnp.dot(wsp_matrix.astype(cd), w_wsp.astype(cd),
                 preferred_element_type=jnp.float32)
         + b_wsp.astype(cd).astype(jnp.float32),
         jnp.dot(le_matrix.astype(cd), w_le.astype(cd),
                 preferred_element_type=jnp.float32)
         + b_le.astype(cd).astype(jnp.float32)],
        axis=-1)

    assert out.shape == (num_nodes, d_model)
    np.testing.assert_allclose(
        np.asarray(out.astype(jnp.float32)), np.asarray(ref), rtol=2e-2, atol=2e-2)

    print("KERNEL_OK")
</pallas_src>

<mosaic_0001>
module attributes {stable_mosaic.version = 11 : i64} {
  func.func @_pe_fused_kernel(%arg0: i32, %arg1: memref<8x128xbf16, #tpu.memory_space<vmem>>, %arg2: memref<128x128xbf16, #tpu.memory_space<vmem>>, %arg3: memref<8x128xbf16, #tpu.memory_space<vmem>>) attributes {dimension_semantics = [#tpu.dimension_semantics<parallel>], iteration_bounds = array<i64: 1>, scalar_prefetch = 0 : i64, scratch_operands = 0 : i64, tpu.core_type = #tpu.core_type<tc>, window_params = [{transform_indices = @transform_0, window_bounds = array<i64: 8, 128>}, {pipeline_mode = #tpu.pipeline_mode<synchronous>, transform_indices = @transform_1, window_bounds = array<i64: 128, 128>}, {transform_indices = @transform_2, window_bounds = array<i64: 8, 128>}]} {
    %c0 = arith.constant 0 : index
    %c0_0 = arith.constant 0 : index
    %0 = vector.load %arg1[%c0, %c0_0] : memref<8x128xbf16, #tpu.memory_space<vmem>>, vector<8x128xbf16>
    %c0_1 = arith.constant 0 : index
    %c0_2 = arith.constant 0 : index
    %1 = vector.load %arg2[%c0_1, %c0_2] : memref<128x128xbf16, #tpu.memory_space<vmem>>, vector<128x128xbf16>
    %cst = arith.constant dense<0.000000e+00> : vector<8x128xf32>
    %2 = tpu.matmul %0, %1, %cst {dimension_numbers = #tpu.dot_dimension_numbers<[1], [0], [0], [1], [0, 0, 1, 1], [], []>} : vector<8x128xbf16>, vector<128x128xbf16>, vector<8x128xf32> -> vector<8x128xf32>
    %3 = arith.truncf %2 : vector<8x128xf32> to vector<8x128xbf16>
    %c0_3 = arith.constant 0 : index
    %c0_4 = arith.constant 0 : index
    %4 = vector.load %arg3[%c0_3, %c0_4] : memref<8x128xbf16, #tpu.memory_space<vmem>>, vector<8x128xbf16>
    tpu.vector_store %arg3[%c0_3, %c0_4], %3 {strides = array<i32>} : memref<8x128xbf16, #tpu.memory_space<vmem>>, vector<8x128xbf16>,
    return
  }
  func.func @transform_0(%arg0: i32) -> (i32, i32) {
    %c0_i32 = arith.constant 0 : i32
    %c0_i32_0 = arith.constant 0 : i32
    return %arg0, %c0_i32 : i32, i32
  }
  func.func @transform_1(%arg0: i32) -> (i32, i32) {
    %c0_i32 = arith.constant 0 : i32
    %c0_i32_0 = arith.constant 0 : i32
    %c0_i32_1 = arith.constant 0 : i32
    return %c0_i32, %c0_i32_0 : i32, i32
  }
  func.func @transform_2(%arg0: i32) -> (i32, i32) {
    %c0_i32 = arith.constant 0 : i32
    %c0_i32_0 = arith.constant 0 : i32
    return %arg0, %c0_i32 : i32, i32
  }
}

module attributes {stable_mosaic.version = 11 : i64} {
  func.func @_pe_fused_kernel(%arg0: i32, %arg1: memref<8x128xbf16, #tpu.memory_space<vmem>>, %arg2: memref<128x128xbf16, #tpu.memory_space<vmem>>, %arg3: memref<8x128xbf16, #tpu.memory_space<vmem>>) attributes {dimension_semantics = [#tpu.dimension_semantics<parallel>], iteration_bounds = array<i64: 1>, scalar_prefetch = 0 : i64, scratch_operands = 0 : i64, tpu.core_type = #tpu.core_type<tc>, window_params = [{transform_indices = @transform_0, window_bounds = array<i64: 8, 128>}, {pipeline_mode = #tpu.pipeline_mode<synchronous>, transform_indices = @transform_1, window_bounds = array<i64: 128, 128>}, {transform_indices = @transform_2, window_bounds = array<i64: 8, 128>}]} {
    %c0 = arith.constant 0 : index
    %c0_0 = arith.constant 0 : index
    %0 = vector.load %arg1[%c0, %c0_0] : memref<8x128xbf16, #tpu.memory_space<vmem>>, vector<8x128xbf16>
    %c0_1 = arith.constant 0 : index
    %c0_2 = arith.constant 0 : index
    %1 = vector.load %arg2[%c0_1, %c0_2] : memref<128x128xbf16, #tpu.memory_space<vmem>>, vector<128x128xbf16>
    %cst = arith.constant dense<0.000000e+00> : vector<8x128xf32>
    %2 = tpu.matmul %0, %1, %cst {dimension_numbers = #tpu.dot_dimension_numbers<[1], [0], [0], [1], [0, 0, 1, 1], [], []>} : vector<8x128xbf16>, vector<128x128xbf16>, vector<8x128xf32> -> vector<8x128xf32>
    %3 = arith.truncf %2 : vector<8x128xf32> to vector<8x128xbf16>
    %c0_3 = arith.constant 0 : index
    %c0_4 = arith.constant 0 : index
    %4 = vector.load %arg3[%c0_3, %c0_4] : memref<8x128xbf16, #tpu.memory_space<vmem>>, vector<8x128xbf16>
    tpu.vector_store %arg3[%c0_3, %c0_4], %3 {strides = array<i32>} : memref<8x128xbf16, #tpu.memory_space<vmem>>, vector<8x128xbf16>,
    return
  }
  func.func @transform_0(%arg0: i32) -> (i32, i32) {
    %c0_i32 = arith.constant 0 : i32
    %c0_i32_0 = arith.constant 0 : i32
    return %arg0, %c0_i32 : i32, i32
  }
  func.func @transform_1(%arg0: i32) -> (i32, i32) {
    %c0_i32 = arith.constant 0 : i32
    %c0_i32_0 = arith.constant 0 : i32
    %c0_i32_1 = arith.constant 0 : i32
    return %c0_i32, %c0_i32_0 : i32, i32
  }
  func.func @transform_2(%arg0: i32) -> (i32, i32) {
    %c0_i32 = arith.constant 0 : i32
    %c0_i32_0 = arith.constant 0 : i32
    return %arg0, %c0_i32 : i32, i32
  }
}

</mosaic_0001>

<llo_original>
// kernel: tpu_custom_call.1
$region0: #{tpu_custom_call.1}
  #allocation0 [shape = 'u32[]', space=smem, size = 0x4, offset = 0x4, fixed_abs, tag = 'smem constant byte address 0x4 - core index']
  #allocation1 [shape = 'u32[72,128]{1,0:T(1,128)}', space=vmem, size = 0x9000, scoped, tag = 'internal scratch']
  %s0 = inlined_call_operand.hbm [shape: bf16[8,128], index: 0, kind: input, shape index: {}]
  %s1 = inlined_call_operand.hbm [shape: bf16[128,128], index: 1, kind: input, shape index: {}]
  %s2 = inlined_call_operand.hbm [shape: bf16[8,128], index: 2, kind: output, shape index: {}]
  %s3 = sld [smem:[#allocation0]]
  $region26: #{tpu_custom_call.1} parent=0
    _
  %s5 = ssub.s32 1, %s3
  %s6 = scalar_select 0, %s5, %s3
  $region1: #{tpu_custom_call.1} parent=0
    #allocation2 [shape = 'u8[2048]{0}', space=vmem, size = 0x800, scoped, tag = 'input window, operand 0, single buffered']
    #allocation3 [shape = 's32[1]{0}', space=sflag, size = 0x4, scoped, tag = 'scoped memory for tpu_custom_call.1']
    #allocation4 [shape = 's32[1]{0}', space=sflag, size = 0x4, scoped, tag = 'scoped memory for tpu_custom_call.1']
    #allocation5 [shape = 'u8[32768]{0}', space=vmem, size = 0x8000, scoped, tag = 'input window, operand 1, single buffered']
    #allocation6 [shape = 's32[1]{0}', space=sflag, size = 0x4, scoped, tag = 'scoped memory for tpu_custom_call.1']
    #allocation7 [shape = 'u8[2048]{0}', space=vmem, size = 0x800, scoped, tag = 'output window, operand 0, single buffered']
    %7 = vsyncpa [#allocation3], 0
    %8 = vsyncpa [#allocation6], 0
    %9 = vsyncpa [#allocation4], 0
    // Predicated region
    $region2: #{tpu_custom_call.1} parent=1 // pred_check
      _
    $region3: #{tpu_custom_call.1} parent=1 // pred_check_branch
      %11 = sbr.rel (0) target = $region5
    $region4: #{tpu_custom_call.1} parent=1 // pred_region
      %13 = vsyncadd [#allocation3], 0
      %s15 = sshll.u32 %s0, 4
      %s16 = int_to_ptr.hbm [resolvable:$true] %s15
      %s17 = sshll.u32 [#allocation2], 4
      %s18 = int_to_ptr.vmem [resolvable:$true] %s17
      %20 = dma.hbm_to_vmem [thread:$0]  %s16, 64, %s18, [#allocation3]
    $region5: #{tpu_custom_call.1} parent=1 // pred_fallthru
      _
    // Predicated region
    $region6: #{tpu_custom_call.1} parent=1 // pred_check
      _
    $region7: #{tpu_custom_call.1} parent=1 // pred_check_branch
      %22 = sbr.rel (0) target = $region9
    $region8: #{tpu_custom_call.1} parent=1 // pred_region
      %24 = vsyncadd [#allocation6], 0
      %s25 = sshll.u32 %s1, 4
      %s26 = int_to_ptr.hbm [resolvable:$true] %s25
      %s27 = sshll.u32 [#allocation5], 4
      %s28 = int_to_ptr.vmem [resolvable:$true] %s27
      %33 = dma.hbm_to_vmem [thread:$0]  %s26, 1024, %s28, [#allocation6], 64, 64, 4
    $region9: #{tpu_custom_call.1} parent=1 // pred_fallthru
      _
    // Predicated region
    $region10: #{tpu_custom_call.1} parent=1 // pred_check
      _
    $region11: #{tpu_custom_call.1} parent=1 // pred_check_branch
      %35 = sbr.rel (0) target = $region13
    $region12: #{tpu_custom_call.1} parent=1 // pred_region
      %37 = dma.done [#allocation3], 64
    $region13: #{tpu_custom_call.1} parent=1 // pred_fallthru
      _
    // Predicated region
    $region14: #{tpu_custom_call.1} parent=1 // pred_check
      _
    $region15: #{tpu_custom_call.1} parent=1 // pred_check_branch
      %39 = sbr.rel (0) target = $region17
    $region16: #{tpu_custom_call.1} parent=1 // pred_region
      %41 = dma.done [#allocation6], 1024
    $region17: #{tpu_custom_call.1} parent=1 // pred_fallthru
      _
    %v42 = vld [vmem:[#allocation2] sm:$0xf]
    %v43 = vld [vmem:[#allocation5] sm:$0xf]
    %v44 = vld [vmem:[#allocation5 + $0x4] sm:$0xf]
    %v45 = vld [vmem:[#allocation5 + $0x8] sm:$0xf]
    %v46 = vld [vmem:[#allocation5 + $0xc] sm:$0xf]
    %v47 = vld [vmem:[#allocation5 + $0x10] sm:$0xf]
    %v48 = vld [vmem:[#allocation5 + $0x14] sm:$0xf]
    %v49 = vld [vmem:[#allocation5 + $0x18] sm:$0xf]
    %v50 = vld [vmem:[#allocation5 + $0x1c] sm:$0xf]
    %v51 = vld [vmem:[#allocation5 + $0x20] sm:$0xf]
    %v52 = vld [vmem:[#allocation5 + $0x24] sm:$0xf]
    %v53 = vld [vmem:[#allocation5 + $0x28] sm:$0xf]
    %v54 = vld [vmem:[#allocation5 + $0x2c] sm:$0xf]
    %v55 = vld [vmem:[#allocation5 + $0x30] sm:$0xf]
    %v56 = vld [vmem:[#allocation5 + $0x34] sm:$0xf]
    %v57 = vld [vmem:[#allocation5 + $0x38] sm:$0xf]
    %v58 = vld [vmem:[#allocation5 + $0x3c] sm:$0xf]
    %v75 = vunpack.c.l.b16 %v43
    %v76 = vunpack.c.l.b16 %v44
    %v77 = vunpack.c.l.b16 %v45
    %v78 = vunpack.c.l.b16 %v46
    %v79 = vunpack.c.l.b16 %v47
    %v80 = vunpack.c.l.b16 %v48
    %v81 = vunpack.c.l.b16 %v49
    %v82 = vunpack.c.l.b16 %v50
    %v83 = vunpack.c.l.b16 %v51
    %v84 = vunpack.c.l.b16 %v52
    %v85 = vunpack.c.l.b16 %v53
    %v86 = vunpack.c.l.b16 %v54
    %v87 = vunpack.c.l.b16 %v55
    %v88 = vunpack.c.l.b16 %v56
    %v89 = vunpack.c.l.b16 %v57
    %v90 = vunpack.c.l.b16 %v58
    %v91 = vpack.c.b16 %v76, %v75
    %v92 = vpack.c.b16 %v78, %v77
    %v93 = vpack.c.b16 %v80, %v79
    %v94 = vpack.c.b16 %v82, %v81
    %v95 = vpack.c.b16 %v84, %v83
    %v96 = vpack.c.b16 %v86, %v85
    %v97 = vpack.c.b16 %v88, %v87
    %v98 = vpack.c.b16 %v90, %v89
    %107 = vmatpush.bf16.msra.mxu0 %v98
    %108 = vmatpush.bf16.msra.mxu0 %v97
    %109 = vmatpush.bf16.msra.mxu0 %v96
    %110 = vmatpush.bf16.msra.mxu0 %v95
    %111 = vmatpush.bf16.msra.mxu0 %v94
    %112 = vmatpush.bf16.msra.mxu0 %v93
    %113 = vmatpush.bf16.msra.mxu0 %v92
    %114 = vmatpush.bf16.msra.mxu0 %v91
    %115 = vmatmul.bf16.gmra.mxu0 %v42
    %v116 = vpop.f32.mrf.mxu0
    %v117 = vadd.f32 0.0, %v116
    %v118 = vpop.f32.mrf.mxu0
    %119 = vdwg.mxu0
    %v120 = vpack.c.bf16 %v117, %v117
    %121 = vst [vmem:[#allocation7] sm:$0xf] %v120
    // Predicated region
    $region18: #{tpu_custom_call.1} parent=1 // pred_check
      _
    $region19: #{tpu_custom_call.1} parent=1 // pred_check_branch
      %123 = sbr.rel (0) target = $region21
    $region20: #{tpu_custom_call.1} parent=1 // pred_region
      %125 = vsyncadd [#allocation4], 0
      %s127 = sshll.u32 [#allocation7], 4
      %s128 = int_to_ptr.vmem [resolvable:$true] %s127
      %s129 = sshll.u32 %s2, 4
      %s130 = int_to_ptr.hbm [resolvable:$true] %s129
      %132 = dma.vmem_to_hbm [thread:$0]  %s128, 64, %s130, [#allocation4]
    $region21: #{tpu_custom_call.1} parent=1 // pred_fallthru
      _
    // Predicated region
    $region22: #{tpu_custom_call.1} parent=1 // pred_check
      _
    $region23: #{tpu_custom_call.1} parent=1 // pred_check_branch
      %134 = sbr.rel (0) target = $region25
    $region24: #{tpu_custom_call.1} parent=1 // pred_region
      %136 = dma.done [#allocation4], 64
    $region25: #{tpu_custom_call.1} parent=1 // pred_fallthru
      _
    %137 = vsyncpa [#allocation3], 1
    %138 = vsyncpa [#allocation6], 1
    %139 = vsyncpa [#allocation4], 1

// kernel: tpu_custom_call.1
$region0: #{tpu_custom_call.1}
  #allocation0 [shape = 'u32[]', space=smem, size = 0x4, offset = 0x4, fixed_abs, tag = 'smem constant byte address 0x4 - core index']
  #allocation1 [shape = 'u32[72,128]{1,0:T(1,128)}', space=vmem, size = 0x9000, scoped, tag = 'internal scratch']
  %s0 = inlined_call_operand.hbm [shape: bf16[8,128], index: 0, kind: input, shape index: {}]
  %s1 = inlined_call_operand.hbm [shape: bf16[128,128], index: 1, kind: input, shape index: {}]
  %s2 = inlined_call_operand.hbm [shape: bf16[8,128], index: 2, kind: output, shape index: {}]
  %s3 = sld [smem:[#allocation0]]
  $region26: #{tpu_custom_call.1} parent=0
    _
  %s5 = ssub.s32 1, %s3
  %s6 = scalar_select 0, %s5, %s3
  $region1: #{tpu_custom_call.1} parent=0
    #allocation2 [shape = 'u8[2048]{0}', space=vmem, size = 0x800, scoped, tag = 'input window, operand 0, single buffered']
    #allocation3 [shape = 's32[1]{0}', space=sflag, size = 0x4, scoped, tag = 'scoped memory for tpu_custom_call.1']
    #allocation4 [shape = 's32[1]{0}', space=sflag, size = 0x4, scoped, tag = 'scoped memory for tpu_custom_call.1']
    #allocation5 [shape = 'u8[32768]{0}', space=vmem, size = 0x8000, scoped, tag = 'input window, operand 1, single buffered']
    #allocation6 [shape = 's32[1]{0}', space=sflag, size = 0x4, scoped, tag = 'scoped memory for tpu_custom_call.1']
    #allocation7 [shape = 'u8[2048]{0}', space=vmem, size = 0x800, scoped, tag = 'output window, operand 0, single buffered']
    %7 = vsyncpa [#allocation3], 0
    %8 = vsyncpa [#allocation6], 0
    %9 = vsyncpa [#allocation4], 0
    // Predicated region
    $region2: #{tpu_custom_call.1} parent=1 // pred_check
      _
    $region3: #{tpu_custom_call.1} parent=1 // pred_check_branch
      %11 = sbr.rel (0) target = $region5
    $region4: #{tpu_custom_call.1} parent=1 // pred_region
      %13 = vsyncadd [#allocation3], 0
      %s15 = sshll.u32 %s0, 4
      %s16 = int_to_ptr.hbm [resolvable:$true] %s15
      %s17 = sshll.u32 [#allocation2], 4
      %s18 = int_to_ptr.vmem [resolvable:$true] %s17
      %20 = dma.hbm_to_vmem [thread:$0]  %s16, 64, %s18, [#allocation3]
    $region5: #{tpu_custom_call.1} parent=1 // pred_fallthru
      _
    // Predicated region
    $region6: #{tpu_custom_call.1} parent=1 // pred_check
      _
    $region7: #{tpu_custom_call.1} parent=1 // pred_check_branch
      %22 = sbr.rel (0) target = $region9
    $region8: #{tpu_custom_call.1} parent=1 // pred_region
      %24 = vsyncadd [#allocation6], 0
      %s25 = sshll.u32 %s1, 4
      %s26 = int_to_ptr.hbm [resolvable:$true] %s25
      %s27 = sshll.u32 [#allocation5], 4
      %s28 = int_to_ptr.vmem [resolvable:$true] %s27
      %33 = dma.hbm_to_vmem [thread:$0]  %s26, 1024, %s28, [#allocation6], 64, 64, 4
    $region9: #{tpu_custom_call.1} parent=1 // pred_fallthru
      _
    // Predicated region
    $region10: #{tpu_custom_call.1} parent=1 // pred_check
      _
    $region11: #{tpu_custom_call.1} parent=1 // pred_check_branch
      %35 = sbr.rel (0) target = $region13
    $region12: #{tpu_custom_call.1} parent=1 // pred_region
      %37 = dma.done [#allocation3], 64
    $region13: #{tpu_custom_call.1} parent=1 // pred_fallthru
      _
    // Predicated region
    $region14: #{tpu_custom_call.1} parent=1 // pred_check
      _
    $region15: #{tpu_custom_call.1} parent=1 // pred_check_branch
      %39 = sbr.rel (0) target = $region17
    $region16: #{tpu_custom_call.1} parent=1 // pred_region
      %41 = dma.done [#allocation6], 1024
    $region17: #{tpu_custom_call.1} parent=1 // pred_fallthru
      _
    %v42 = vld [vmem:[#allocation2] sm:$0xf]
    %v43 = vld [vmem:[#allocation5] sm:$0xf]
    %v44 = vld [vmem:[#allocation5 + $0x4] sm:$0xf]
    %v45 = vld [vmem:[#allocation5 + $0x8] sm:$0xf]
    %v46 = vld [vmem:[#allocation5 + $0xc] sm:$0xf]
    %v47 = vld [vmem:[#allocation5 + $0x10] sm:$0xf]
    %v48 = vld [vmem:[#allocation5 + $0x14] sm:$0xf]
    %v49 = vld [vmem:[#allocation5 + $0x18] sm:$0xf]
    %v50 = vld [vmem:[#allocation5 + $0x1c] sm:$0xf]
    %v51 = vld [vmem:[#allocation5 + $0x20] sm:$0xf]
    %v52 = vld [vmem:[#allocation5 + $0x24] sm:$0xf]
    %v53 = vld [vmem:[#allocation5 + $0x28] sm:$0xf]
    %v54 = vld [vmem:[#allocation5 + $0x2c] sm:$0xf]
    %v55 = vld [vmem:[#allocation5 + $0x30] sm:$0xf]
    %v56 = vld [vmem:[#allocation5 + $0x34] sm:$0xf]
    %v57 = vld [vmem:[#allocation5 + $0x38] sm:$0xf]
    %v58 = vld [vmem:[#allocation5 + $0x3c] sm:$0xf]
    %v75 = vunpack.c.l.b16 %v43
    %v76 = vunpack.c.l.b16 %v44
    %v77 = vunpack.c.l.b16 %v45
    %v78 = vunpack.c.l.b16 %v46
    %v79 = vunpack.c.l.b16 %v47
    %v80 = vunpack.c.l.b16 %v48
    %v81 = vunpack.c.l.b16 %v49
    %v82 = vunpack.c.l.b16 %v50
    %v83 = vunpack.c.l.b16 %v51
    %v84 = vunpack.c.l.b16 %v52
    %v85 = vunpack.c.l.b16 %v53
    %v86 = vunpack.c.l.b16 %v54
    %v87 = vunpack.c.l.b16 %v55
    %v88 = vunpack.c.l.b16 %v56
    %v89 = vunpack.c.l.b16 %v57
    %v90 = vunpack.c.l.b16 %v58
    %v91 = vpack.c.b16 %v76, %v75
    %v92 = vpack.c.b16 %v78, %v77
    %v93 = vpack.c.b16 %v80, %v79
    %v94 = vpack.c.b16 %v82, %v81
    %v95 = vpack.c.b16 %v84, %v83
    %v96 = vpack.c.b16 %v86, %v85
    %v97 = vpack.c.b16 %v88, %v87
    %v98 = vpack.c.b16 %v90, %v89
    %107 = vmatpush.bf16.msra.mxu0 %v98
    %108 = vmatpush.bf16.msra.mxu0 %v97
    %109 = vmatpush.bf16.msra.mxu0 %v96
    %110 = vmatpush.bf16.msra.mxu0 %v95
    %111 = vmatpush.bf16.msra.mxu0 %v94
    %112 = vmatpush.bf16.msra.mxu0 %v93
    %113 = vmatpush.bf16.msra.mxu0 %v92
    %114 = vmatpush.bf16.msra.mxu0 %v91
    %115 = vmatmul.bf16.gmra.mxu0 %v42
    %v116 = vpop.f32.mrf.mxu0
    %v117 = vadd.f32 0.0, %v116
    %v118 = vpop.f32.mrf.mxu0
    %119 = vdwg.mxu0
    %v120 = vpack.c.bf16 %v117, %v117
    %121 = vst [vmem:[#allocation7] sm:$0xf] %v120
    // Predicated region
    $region18: #{tpu_custom_call.1} parent=1 // pred_check
      _
    $region19: #{tpu_custom_call.1} parent=1 // pred_check_branch
      %123 = sbr.rel (0) target = $region21
    $region20: #{tpu_custom_call.1} parent=1 // pred_region
      %125 = vsyncadd [#allocation4], 0
      %s127 = sshll.u32 [#allocation7], 4
      %s128 = int_to_ptr.vmem [resolvable:$true] %s127
      %s129 = sshll.u32 %s2, 4
      %s130 = int_to_ptr.hbm [resolvable:$true] %s129
      %132 = dma.vmem_to_hbm [thread:$0]  %s128, 64, %s130, [#allocation4]
    $region21: #{tpu_custom_call.1} parent=1 // pred_fallthru
      _
    // Predicated region
    $region22: #{tpu_custom_call.1} parent=1 // pred_check
      _
    $region23: #{tpu_custom_call.1} parent=1 // pred_check_branch
      %134 = sbr.rel (0) target = $region25
    $region24: #{tpu_custom_call.1} parent=1 // pred_region
      %136 = dma.done [#allocation4], 64
    $region25: #{tpu_custom_call.1} parent=1 // pred_fallthru
      _
    %137 = vsyncpa [#allocation3], 1
    %138 = vsyncpa [#allocation6], 1
    %139 = vsyncpa [#allocation4], 1

</llo_original>
